<compile_context>
chip_gen: v6e
topology: v6e:2x2x1
jax: 0.10.0
libtpu: 0.0.40
codegen_flags: <defaults>
</compile_context>

<pallas_src>
import functools

import jax
import jax.numpy as jnp
from jax.experimental import pallas as pl
from jax.experimental.pallas import tpu as pltpu

LN_EPS = 1e-5  # torch.nn.LayerNorm default


def _adapter_kernel(x_ref, w_ref, b_ref, g_ref, beta_ref, o_ref):
    # ---- Linear: (tm, K) @ (K, N) + (1, N), accumulate in f32 ----
    y = jnp.dot(x_ref[...], w_ref[...], preferred_element_type=jnp.float32)
    y = y + b_ref[...].astype(jnp.float32)

    # ---- LayerNorm over the last (feature) axis, f32 statistics ----
    mean = jnp.mean(y, axis=-1, keepdims=True)
    centered = y - mean
    var = jnp.mean(centered * centered, axis=-1, keepdims=True)
    inv = jax.lax.rsqrt(var + LN_EPS)
    y_norm = centered * inv

    out = y_norm * g_ref[...].astype(jnp.float32) + beta_ref[...].astype(jnp.float32)
    o_ref[...] = out.astype(o_ref.dtype)


def _round_up(x, m):
    return ((x + m - 1) // m) * m


def _num_tensorcores():
    """Best-effort TensorCore-per-chip count (v7x has 2, v5e/v6e have 1)."""
    try:
        kind = jax.devices()[0].device_kind.lower()
    except Exception:  # no TPU visible at trace time — be conservative
        return 1
    return 2 if "v7" in kind else 1


@functools.partial(jax.jit, static_argnames=("tm", "out_dtype"))
def condition_adapter(x, w_t, bias, gamma, beta, *, tm=1024, out_dtype=None):
    """Fused Linear + LayerNorm.

    x: (..., K). w_t: (K, N) = nn.Linear weight transposed. bias/gamma/beta: (N,).
    Matmul accumulation and LN statistics are always f32; I/O may be f32 or
    bf16 (`out_dtype` defaults to x.dtype). `tm` is the row tile — the only
    tuning knob; sweep 512-2048 for large M.
    """
    orig_shape = x.shape
    K = orig_shape[-1]
    N = w_t.shape[1]
    x2d = x.reshape(-1, K)
    M = x2d.shape[0]
    out_dtype = x.dtype if out_dtype is None else out_dtype

    # --- choose the row tile (all static shape math) ---
    itemsize = jnp.dtype(x.dtype).itemsize
    sub = max(8, 32 // itemsize)                  # native sublane multiple: 8 f32, 16 bf16
    m_sub = _round_up(M, sub)                     # rounded row count
    tm_eff = max(sub, (int(tm) // sub) * sub)     # requested tile, sublane-aligned
    tm_eff = min(tm_eff, m_sub)                   # never exceed the (rounded) row count

    # Dual-TC chips (v7x): make the step count even so both cores get equal
    # work. Single-TC chips keep the largest tile (per-step overhead only).
    num_tc = _num_tensorcores()
    steps = pl.cdiv(M, tm_eff)
    if num_tc >= 2 and steps % 2 == 1 and m_sub >= 2 * sub:
        target_steps = 2 if steps == 1 else steps + 1
        tm_eff = max(sub, _round_up(pl.cdiv(m_sub, target_steps), sub))
        steps = pl.cdiv(M, tm_eff)

    bias2 = bias.reshape(1, N)
    gamma2 = gamma.reshape(1, N)
    beta2 = beta.reshape(1, N)

    out = pl.pallas_call(
        _adapter_kernel,
        out_shape=jax.ShapeDtypeStruct((M, N), out_dtype),
        grid_spec=pltpu.PrefetchScalarGridSpec(
            num_scalar_prefetch=0,
            grid=(steps,),                                  # ragged last block OK
            in_specs=[
                pl.BlockSpec((tm_eff, K), lambda i: (i, 0)),  # x row tile
                pl.BlockSpec((K, N), lambda i: (0, 0)),       # resident weight
                pl.BlockSpec((1, N), lambda i: (0, 0)),       # bias
                pl.BlockSpec((1, N), lambda i: (0, 0)),       # LN gamma
                pl.BlockSpec((1, N), lambda i: (0, 0)),       # LN beta
            ],
            out_specs=pl.BlockSpec((tm_eff, N), lambda i: (i, 0)),
        ),
        compiler_params=pltpu.CompilerParams(
            dimension_semantics=("parallel",)
        ),
    )(x2d, w_t, bias2, gamma2, beta2)

    return out.reshape(orig_shape[:-1] + (N,))


def _reference(x, w_t, bias, gamma, beta):
    y = jnp.einsum("...k,kn->...n", x.astype(jnp.float32),
                   w_t.astype(jnp.float32)) + bias
    mean = jnp.mean(y, axis=-1, keepdims=True)
    var = jnp.mean((y - mean) ** 2, axis=-1, keepdims=True)
    return (y - mean) * jax.lax.rsqrt(var + LN_EPS) * gamma + beta


if __name__ == "__main__":
    # config = {'condition_dim': 32, 'cross_attention_dim': 64}
    condition_dim, cross_attention_dim = 32, 64

    key = jax.random.PRNGKey(0)
    kx, kw, kb, kg, kbeta, kx2, kx3 = jax.random.split(key, 7)

    # nn.Linear weight is (out, in); store transposed (in, out) for the kernel.
    bound = 1.0 / (condition_dim ** 0.5)
    w_t = jax.random.uniform(
        kw, (condition_dim, cross_attention_dim),
        minval=-bound, maxval=bound, dtype=jnp.float32)
    bias = jax.random.uniform(
        kb, (cross_attention_dim,), minval=-bound, maxval=bound,
        dtype=jnp.float32)

    # LayerNorm default init: gamma=1, beta=0 (perturb slightly to exercise them).
    gamma = jnp.ones((cross_attention_dim,), jnp.float32) \
        + 0.01 * jax.random.normal(kg, (cross_attention_dim,), jnp.float32)
    beta = 0.01 * jax.random.normal(kbeta, (cross_attention_dim,), jnp.float32)

    # Case 1: batch=2, seq=8 (M=16, single grid step on single-TC chips).
    batch, seq = 2, 8
    x = jax.random.normal(kx, (batch, seq, condition_dim), dtype=jnp.float32)
    out = jax.block_until_ready(condition_adapter(x, w_t, bias, gamma, beta))
    ref = _reference(x, w_t, bias, gamma, beta)
    assert out.shape == (batch, seq, cross_attention_dim)
    assert jnp.allclose(out, ref, atol=1e-5, rtol=1e-5)

    # Case 2: ragged row count (M=21, not a sublane/tile multiple) — exercises
    # the ragged edge-block path with no host-side padding.
    x2 = jax.random.normal(kx2, (3, 7, condition_dim), dtype=jnp.float32)
    out2 = jax.block_until_ready(condition_adapter(x2, w_t, bias, gamma, beta))
    ref2 = _reference(x2, w_t, bias, gamma, beta)
    assert out2.shape == (3, 7, cross_attention_dim)
    assert jnp.allclose(out2, ref2, atol=1e-5, rtol=1e-5)

    # Case 3: bf16 in / bf16 out path (f32 accumulation + LN stats in-kernel).
    x3 = jax.random.normal(kx3, (4, 13, condition_dim), dtype=jnp.bfloat16)
    out3 = jax.block_until_ready(
        condition_adapter(x3, w_t.astype(jnp.bfloat16), bias, gamma, beta,
                          out_dtype=jnp.bfloat16))
    ref3 = _reference(x3, w_t, bias, gamma, beta)
    assert out3.shape == (4, 13, cross_attention_dim)
    assert out3.dtype == jnp.bfloat16
    assert jnp.allclose(out3.astype(jnp.float32), ref3, atol=5e-2, rtol=5e-2)

    print("KERNEL_OK")
</pallas_src>

<mosaic_0001>
module attributes {stable_mosaic.version = 11 : i64} {
  func.func @_adapter_kernel(%arg0: i32, %arg1: memref<16x32xf32, #tpu.memory_space<vmem>>, %arg2: memref<32x64xf32, #tpu.memory_space<vmem>>, %arg3: memref<1x64xf32, #tpu.memory_space<vmem>>, %arg4: memref<1x64xf32, #tpu.memory_space<vmem>>, %arg5: memref<1x64xf32, #tpu.memory_space<vmem>>, %arg6: memref<16x64xf32, #tpu.memory_space<vmem>>) attributes {dimension_semantics = [#tpu.dimension_semantics<parallel>], iteration_bounds = array<i64: 1>, scalar_prefetch = 0 : i64, scratch_operands = 0 : i64, tpu.core_type = #tpu.core_type<tc>, window_params = [{transform_indices = @transform_0, window_bounds = array<i64: 16, 32>}, {pipeline_mode = #tpu.pipeline_mode<synchronous>, transform_indices = @transform_1, window_bounds = array<i64: 32, 64>}, {pipeline_mode = #tpu.pipeline_mode<synchronous>, transform_indices = @transform_2, window_bounds = array<i64: 1, 64>}, {pipeline_mode = #tpu.pipeline_mode<synchronous>, transform_indices = @transform_3, window_bounds = array<i64: 1, 64>}, {pipeline_mode = #tpu.pipeline_mode<synchronous>, transform_indices = @transform_4, window_bounds = array<i64: 1, 64>}, {transform_indices = @transform_5, window_bounds = array<i64: 16, 64>}]} {
    %c0 = arith.constant 0 : index
    %c0_0 = arith.constant 0 : index
    %0 = vector.load %arg1[%c0, %c0_0] : memref<16x32xf32, #tpu.memory_space<vmem>>, vector<16x32xf32>
    %c0_1 = arith.constant 0 : index
    %c0_2 = arith.constant 0 : index
    %1 = vector.load %arg2[%c0_1, %c0_2] : memref<32x64xf32, #tpu.memory_space<vmem>>, vector<32x64xf32>
    %cst = arith.constant dense<0.000000e+00> : vector<16x64xf32>
    %2 = tpu.matmul %0, %1, %cst {dimension_numbers = #tpu.dot_dimension_numbers<[1], [0], [0], [1], [0, 0, 1, 1], [], []>} : vector<16x32xf32>, vector<32x64xf32>, vector<16x64xf32> -> vector<16x64xf32>
    %c0_3 = arith.constant 0 : index
    %c0_4 = arith.constant 0 : index
    %3 = vector.load %arg3[%c0_3, %c0_4] : memref<1x64xf32, #tpu.memory_space<vmem>>, vector<1x64xf32>
    %4 = vector.broadcast %3 : vector<1x64xf32> to vector<16x64xf32>
    %5 = arith.addf %2, %4 : vector<16x64xf32>
    %cst_5 = arith.constant dense<0.000000e+00> : vector<16xf32>
    %6 = vector.multi_reduction <add>, %5, %cst_5 [1] : vector<16x64xf32> to vector<16xf32>
    %7 = vector.shape_cast %6 : vector<16xf32> to vector<16x1xf32>
    %cst_6 = arith.constant 6.400000e+01 : f32
    %8 = vector.broadcast %cst_6 : f32 to vector<16x1xf32>
    %9 = arith.divf %7, %8 : vector<16x1xf32>
    %10 = vector.broadcast %9 : vector<16x1xf32> to vector<16x64xf32>
    %11 = arith.subf %5, %10 : vector<16x64xf32>
    %12 = arith.mulf %11, %11 : vector<16x64xf32>
    %cst_7 = arith.constant dense<0.000000e+00> : vector<16xf32>
    %13 = vector.multi_reduction <add>, %12, %cst_7 [1] : vector<16x64xf32> to vector<16xf32>
    %14 = vector.shape_cast %13 : vector<16xf32> to vector<16x1xf32>
    %cst_8 = arith.constant 6.400000e+01 : f32
    %15 = vector.broadcast %cst_8 : f32 to vector<16x1xf32>
    %16 = arith.divf %14, %15 : vector<16x1xf32>
    %cst_9 = arith.constant 9.99999974E-6 : f32
    %17 = vector.broadcast %cst_9 : f32 to vector<16x1xf32>
    %18 = arith.addf %16, %17 : vector<16x1xf32>
    %19 = math.rsqrt %18 : vector<16x1xf32>
    %20 = vector.broadcast %19 : vector<16x1xf32> to vector<16x64xf32>
    %21 = arith.mulf %11, %20 : vector<16x64xf32>
    %c0_10 = arith.constant 0 : index
    %c0_11 = arith.constant 0 : index
    %22 = vector.load %arg4[%c0_10, %c0_11] : memref<1x64xf32, #tpu.memory_space<vmem>>, vector<1x64xf32>
    %23 = vector.broadcast %22 : vector<1x64xf32> to vector<16x64xf32>
    %24 = arith.mulf %21, %23 : vector<16x64xf32>
    %c0_12 = arith.constant 0 : index
    %c0_13 = arith.constant 0 : index
    %25 = vector.load %arg5[%c0_12, %c0_13] : memref<1x64xf32, #tpu.memory_space<vmem>>, vector<1x64xf32>
    %26 = vector.broadcast %25 : vector<1x64xf32> to vector<16x64xf32>
    %27 = arith.addf %24, %26 : vector<16x64xf32>
    %c0_14 = arith.constant 0 : index
    %c0_15 = arith.constant 0 : index
    %28 = vector.load %arg6[%c0_14, %c0_15] : memref<16x64xf32, #tpu.memory_space<vmem>>, vector<16x64xf32>
    tpu.vector_store %arg6[%c0_14, %c0_15], %27 {strides = array<i32>} : memref<16x64xf32, #tpu.memory_space<vmem>>, vector<16x64xf32>,
    return
  }
  func.func @transform_0(%arg0: i32) -> (i32, i32) {
    %c0_i32 = arith.constant 0 : i32
    %c0_i32_0 = arith.constant 0 : i32
    return %arg0, %c0_i32 : i32, i32
  }
  func.func @transform_1(%arg0: i32) -> (i32, i32) {
    %c0_i32 = arith.constant 0 : i32
    %c0_i32_0 = arith.constant 0 : i32
    %c0_i32_1 = arith.constant 0 : i32
    return %c0_i32, %c0_i32_0 : i32, i32
  }
  func.func @transform_2(%arg0: i32) -> (i32, i32) {
    %c0_i32 = arith.constant 0 : i32
    %c0_i32_0 = arith.constant 0 : i32
    %c0_i32_1 = arith.constant 0 : i32
    return %c0_i32, %c0_i32_0 : i32, i32
  }
  func.func @transform_3(%arg0: i32) -> (i32, i32) {
    %c0_i32 = arith.constant 0 : i32
    %c0_i32_0 = arith.constant 0 : i32
    %c0_i32_1 = arith.constant 0 : i32
    return %c0_i32, %c0_i32_0 : i32, i32
  }
  func.func @transform_4(%arg0: i32) -> (i32, i32) {
    %c0_i32 = arith.constant 0 : i32
    %c0_i32_0 = arith.constant 0 : i32
    %c0_i32_1 = arith.constant 0 : i32
    return %c0_i32, %c0_i32_0 : i32, i32
  }
  func.func @transform_5(%arg0: i32) -> (i32, i32) {
    %c0_i32 = arith.constant 0 : i32
    %c0_i32_0 = arith.constant 0 : i32
    return %arg0, %c0_i32 : i32, i32
  }
}

</mosaic_0001>

<llo_original>
// kernel: condition_adapter.1
$region0: #{condition_adapter.1}
  #allocation0 [shape = 'u32[]', space=smem, size = 0x4, offset = 0x4, fixed_abs, tag = 'smem constant byte address 0x4 - core index']
  #allocation1 [shape = 'u32[144,128]{1,0:T(1,128)}', space=vmem, size = 0x12000, scoped, tag = 'internal scratch']
  %s0 = inlined_call_operand.hbm [shape: f32[16,32], index: 0, kind: input, shape index: {}]
  %s1 = inlined_call_operand.hbm [shape: f32[32,64], index: 1, kind: input, shape index: {}]
  %s2 = inlined_call_operand.vmem [shape: f32[1,64], index: 2, kind: input, shape index: {}]
  %s3 = inlined_call_operand.vmem [shape: f32[1,64], index: 3, kind: input, shape index: {}]
  %s4 = inlined_call_operand.vmem [shape: f32[1,64], index: 4, kind: input, shape index: {}]
  %s5 = inlined_call_operand.hbm [shape: f32[16,64], index: 5, kind: output, shape index: {}]
  %s6 = sld [smem:[#allocation0]]
  $region38: #{condition_adapter.1} parent=0
    _
  %s8 = ssub.s32 1, %s6
  %s9 = scalar_select 0, %s8, %s6
  $region1: #{condition_adapter.1} parent=0
    #allocation2 [shape = 'u8[8192]{0}', space=vmem, size = 0x2000, scoped, tag = 'input window, operand 0, single buffered']
    #allocation3 [shape = 's32[1]{0}', space=sflag, size = 0x4, scoped, tag = 'scoped memory for condition_adapter.1']
    #allocation4 [shape = 's32[1]{0}', space=sflag, size = 0x4, scoped, tag = 'scoped memory for condition_adapter.1']
    #allocation5 [shape = 'u8[16384]{0}', space=vmem, size = 0x4000, scoped, tag = 'input window, operand 1, single buffered']
    #allocation6 [shape = 's32[1]{0}', space=sflag, size = 0x4, scoped, tag = 'scoped memory for condition_adapter.1']
    #allocation7 [shape = 'u8[8192]{0}', space=vmem, size = 0x2000, scoped, tag = 'output window, operand 0, single buffered']
    %10 = vsyncpa [#allocation3], 0
    %11 = vsyncpa [#allocation6], 0
    %12 = vsyncpa [#allocation4], 0
    // Predicated region
    $region2: #{condition_adapter.1} parent=1 // pred_check
      _
    $region3: #{condition_adapter.1} parent=1 // pred_check_branch
      %14 = sbr.rel (0) target = $region5
    $region4: #{condition_adapter.1} parent=1 // pred_region
      %s16 = ssub.s32 256, 256
      %17 = vsyncadd [#allocation3], %s16
      %s18 = sshll.u32 [#allocation2], 4
      %s19 = int_to_ptr.vmem [resolvable:$true] %s18
      %24 = dma.hbm_to_vmem [thread:$0]  %s0, 256, %s19, [#allocation3], 128, 128, 8
    $region5: #{condition_adapter.1} parent=1 // pred_fallthru
      _
    // Predicated region
    $region6: #{condition_adapter.1} parent=1 // pred_check
      _
    $region7: #{condition_adapter.1} parent=1 // pred_check_branch
      %26 = sbr.rel (0) target = $region9
    $region8: #{condition_adapter.1} parent=1 // pred_region
      %s28 = ssub.s32 512, 512
      %29 = vsyncadd [#allocation6], %s28
      %s30 = sshll.u32 [#allocation5], 4
      %s31 = int_to_ptr.vmem [resolvable:$true] %s30
      %36 = dma.hbm_to_vmem [thread:$0]  %s1, 512, %s31, [#allocation6], 128, 128, 8
    $region9: #{condition_adapter.1} parent=1 // pred_fallthru
      _
    // Predicated region
    $region10: #{condition_adapter.1} parent=1 // pred_check
      _
    $region11: #{condition_adapter.1} parent=1 // pred_check_branch
      %38 = sbr.rel (0) target = $region13
    $region12: #{condition_adapter.1} parent=1 // pred_region
      _
    $region13: #{condition_adapter.1} parent=1 // pred_fallthru
      _
    // Predicated region
    $region14: #{condition_adapter.1} parent=1 // pred_check
      _
    $region15: #{condition_adapter.1} parent=1 // pred_check_branch
      %40 = sbr.rel (0) target = $region17
    $region16: #{condition_adapter.1} parent=1 // pred_region
      _
    $region17: #{condition_adapter.1} parent=1 // pred_fallthru
      _
    // Predicated region
    $region18: #{condition_adapter.1} parent=1 // pred_check
      _
    $region19: #{condition_adapter.1} parent=1 // pred_check_branch
      %42 = sbr.rel (0) target = $region21
    $region20: #{condition_adapter.1} parent=1 // pred_region
      _
    $region21: #{condition_adapter.1} parent=1 // pred_fallthru
      _
    // Predicated region
    $region22: #{condition_adapter.1} parent=1 // pred_check
      _
    $region23: #{condition_adapter.1} parent=1 // pred_check_branch
      %44 = sbr.rel (0) target = $region25
    $region24: #{condition_adapter.1} parent=1 // pred_region
      %45 = dma.done [#allocation3], 256
    $region25: #{condition_adapter.1} parent=1 // pred_fallthru
      _
    // Predicated region
    $region26: #{condition_adapter.1} parent=1 // pred_check
      _
    $region27: #{condition_adapter.1} parent=1 // pred_check_branch
      %47 = sbr.rel (0) target = $region29
    $region28: #{condition_adapter.1} parent=1 // pred_region
      %48 = dma.done [#allocation6], 512
    $region29: #{condition_adapter.1} parent=1 // pred_fallthru
      _
    %v49 = vld [vmem:[#allocation2] sm:$0xff]
    %v50 = vld [vmem:[#allocation2 + $0x8] sm:$0xff]
    %v51 = vld [vmem:[#allocation5] sm:$0xff]
    %v52 = vld [vmem:[#allocation5 + $0x8] sm:$0xff]
    %v53 = vld [vmem:[#allocation5 + $0x10] sm:$0xff]
    %v54 = vld [vmem:[#allocation5 + $0x18] sm:$0xff]
    %v55 = vld [vmem:[%s2] sm:$0x1]
    %v57 = vlaneseq
    %v58 = vshrl.u32 %v57, 7
    %v59 = vsub.s32 0, %v58
    %v60 = vrot.slane %v55, %v59
    %vm62 = vcmask 261120
    %v64 = vsel %vm62, %v49, 0
    %v67 = vsel %vm62, %v50, 0
    %69 = vmatprep.subr.mxu0 0.0
    %70 = vmatpush1.msra.mxu0 0.0
    %71 = vmatprep.subr.mxu0 0.0
    %72 = vmatpush1.msra.mxu0 0.0
    %73 = vmatprep.subr.mxu0 0.0
    %74 = vmatpush1.msra.mxu0 0.0
    %75 = vmatprep.subr.mxu0 0.0
    %76 = vmatpush1.msra.mxu0 0.0
    %77 = vmatprep.subr.mxu0 0.0
    %78 = vmatpush1.msra.mxu0 0.0
    %79 = vmatprep.subr.mxu0 0.0
    %80 = vmatpush1.msra.mxu0 0.0
    %81 = vmatprep.subr.mxu0 0.0
    %82 = vmatpush1.msra.mxu0 0.0
    %83 = vmatprep.subr.mxu0 0.0
    %84 = vmatpush1.msra.mxu0 0.0
    %85 = vmatprep.subr.mxu0 0.0
    %86 = vmatpush1.msra.mxu0 0.0
    %87 = vmatprep.subr.mxu0 0.0
    %88 = vmatpush1.msra.mxu0 0.0
    %89 = vmatprep.subr.mxu0 0.0
    %90 = vmatpush1.msra.mxu0 0.0
    %91 = vmatprep.subr.mxu0 0.0
    %92 = vmatpush1.msra.mxu0 0.0
    %93 = vmatprep.subr.mxu0 0.0
    %94 = vmatpush1.msra.mxu0 %v54
    %95 = vmatprep.subr.mxu0 0.0
    %96 = vmatpush1.msra.mxu0 %v53
    %97 = vmatprep.subr.mxu0 0.0
    %98 = vmatpush1.msra.mxu0 %v52
    %99 = vmatprep.subr.mxu0 0.0
    %100 = vmatpush1.msra.mxu0 %v51
    %101 = vmatprep.subr.mxu0 0.0
    %102 = vmatpush2.msra.mxu0 0.0
    %103 = vmatprep.subr.mxu0 0.0
    %104 = vmatpush2.msra.mxu0 0.0
    %105 = vmatprep.subr.mxu0 0.0
    %106 = vmatpush2.msra.mxu0 0.0
    %107 = vmatprep.subr.mxu0 0.0
    %108 = vmatpush2.msra.mxu0 0.0
    %109 = vmatprep.subr.mxu0 0.0
    %110 = vmatpush2.msra.mxu0 0.0
    %111 = vmatprep.subr.mxu0 0.0
    %112 = vmatpush2.msra.mxu0 0.0
    %113 = vmatprep.subr.mxu0 0.0
    %114 = vmatpush2.msra.mxu0 0.0
    %115 = vmatprep.subr.mxu0 0.0
    %116 = vmatpush2.msra.mxu0 0.0
    %117 = vmatprep.subr.mxu0 0.0
    %118 = vmatpush2.msra.mxu0 0.0
    %119 = vmatprep.subr.mxu0 0.0
    %120 = vmatpush2.msra.mxu0 0.0
    %121 = vmatprep.subr.mxu0 0.0
    %122 = vmatpush2.msra.mxu0 0.0
    %123 = vmatprep.subr.mxu0 0.0
    %124 = vmatpush2.msra.mxu0 0.0
    %125 = vmatprep.subr.mxu0 0.0
    %126 = vmatpush2.msra.mxu0 0.0
    %127 = vmatprep.subr.mxu0 0.0
    %128 = vmatpush2.msra.mxu0 0.0
    %129 = vmatprep.subr.mxu0 0.0
    %130 = vmatpush2.msra.mxu0 0.0
    %131 = vmatprep.subr.mxu0 0.0
    %132 = vmatpush2.msra.mxu0 0.0
    %133 = vmatprep.mubr.f32.mxu0 0.0
    %134 = vmatmul.mubr.f32.gmra.mxu0 %v64
    %v135 = vpop.f32.mrf.mxu0
    %v136 = vadd.f32 %v60, %v135
    %v137 = vpop.f32.mrf.mxu0
    %138 = vmatprep.mubr.f32.mxu0 0.0
    %139 = vmatmul.mubr.f32.gmra.mxu0 %v67
    %v140 = vpop.f32.mrf.mxu0
    %v141 = vadd.f32 %v60, %v140
    %v142 = vpop.f32.mrf.mxu0
    %143 = vdwg.mxu0
    %vm144 = vcmask 523264
    %v145 = vsel %vm144, %v136, 0.0
    %146 = vadd.xlane.f32.xlu0 %v145
    %v147 = vpop.xlane.xlu0 %146
    %v148 = vsel %vm144, %v141, 0.0
    %149 = vadd.xlane.f32.xlu0 %v148
    %v150 = vpop.xlane.xlu0 %149
    %v151 = vrcp.pop 64.0
    %v152 = vmul.f32 %v147, %v151
    %v153 = vmul.f32 %v150, %v151
    %v154 = vsub.f32 %v136, %v152
    %v155 = vsub.f32 %v141, %v153
    %v156 = vmul.f32 %v154, %v154
    %v157 = vmul.f32 %v155, %v155
    %v158 = vsel %vm144, %v156, 0.0
    %159 = vadd.xlane.f32.xlu0 %v158
    %v160 = vpop.xlane.xlu0 %159
    %v161 = vsel %vm144, %v157, 0.0
    %162 = vadd.xlane.f32.xlu0 %v161
    %v163 = vpop.xlane.xlu0 %162
    %v164 = vmul.f32 %v160, %v151
    %v165 = vmul.f32 %v163, %v151
    %v166 = vadd.f32 %v164, 1e-05
    %v167 = vadd.f32 %v165, 1e-05
    %v168 = vrsqrt.pop %v166
    %v169 = vrsqrt.pop %v167
    %v170 = vmul.f32 %v154, %v168
    %v171 = vmul.f32 %v155, %v169
    %v172 = vld [vmem:[%s3] sm:$0x1]
    %v174 = vlaneseq
    %v175 = vshrl.u32 %v174, 7
    %v176 = vsub.s32 0, %v175
    %v177 = vrot.slane %v172, %v176
    %v179 = vmul.f32 %v170, %v177
    %v180 = vmul.f32 %v171, %v177
    %v181 = vld [vmem:[%s4] sm:$0x1]
    %v183 = vlaneseq
    %v184 = vshrl.u32 %v183, 7
    %v185 = vsub.s32 0, %v184
    %v186 = vrot.slane %v181, %v185
    %v188 = vadd.f32 %v179, %v186
    %v189 = vadd.f32 %v180, %v186
    %190 = vst.msk [vmem:[#allocation7] sm:$0xff] %vm144, %v188
    %191 = vst.msk [vmem:[#allocation7 + $0x8] sm:$0xff] %vm144, %v189
    // Predicated region
    $region30: #{condition_adapter.1} parent=1 // pred_check
      _
    $region31: #{condition_adapter.1} parent=1 // pred_check_branch
      %193 = sbr.rel (0) target = $region33
    $region32: #{condition_adapter.1} parent=1 // pred_region
      %s195 = ssub.s32 256, 256
      %196 = vsyncadd [#allocation4], %s195
      %s197 = sshll.u32 [#allocation7], 4
      %s198 = int_to_ptr.vmem [resolvable:$true] %s197
      %203 = dma.vmem_to_hbm [thread:$0]  %s198, 256, %s5, [#allocation4], 128, 128, 8
    $region33: #{condition_adapter.1} parent=1 // pred_fallthru
      _
    // Predicated region
    $region34: #{condition_adapter.1} parent=1 // pred_check
      _
    $region35: #{condition_adapter.1} parent=1 // pred_check_branch
      %205 = sbr.rel (0) target = $region37
    $region36: #{condition_adapter.1} parent=1 // pred_region
      %206 = dma.done [#allocation4], 256
    $region37: #{condition_adapter.1} parent=1 // pred_fallthru
      _
    %207 = vsyncpa [#allocation3], 1
    %208 = vsyncpa [#allocation6], 1
    %209 = vsyncpa [#allocation4], 1

</llo_original>
